<compile_context>
chip_gen: v5e
topology: v5e:2x2
jax: 0.10.0
libtpu: 0.0.40
codegen_flags: <defaults>
</compile_context>

<pallas_src>
import functools

import jax
import jax.numpy as jnp
from jax.experimental import pallas as pl
from jax.experimental.pallas import tpu as pltpu

IGNORE_INDEX = 255

# Scoped-VMEM limit requested from Mosaic.  Sized for v7x (64 MiB physical VMEM
# per TensorCore, 32 MiB scoped default); v5e/v6e have 128 MiB physical
# (16 / 32 MiB scoped defaults) so the same explicit limit is safe everywhere.
_VMEM_LIMIT_BYTES = 48 * 1024 * 1024
# What the tile-sizing model may "spend" (leaves ~12 MiB of the limit as slack
# for compiler scratch / model error).
_VMEM_MODEL_BUDGET = 36 * 1024 * 1024
# Bound on elements per (C, TPX) value so Mosaic's per-op unrolling / register
# pressure stays sane; well past the point where per-step overhead matters.
_MAX_TILE_ELEMS = 2 * 1024 * 1024


def _sublane_tile(itemsize):
    # VMEM tiling: (8,128) for 32-bit, (16,128) for 16-bit, (32,128) for 8-bit.
    return {1: 32, 2: 16, 4: 8}.get(itemsize, 8)


def _round_up(x, m):
    return ((x + m - 1) // m) * m


def _choose_tile_px(C, HW, N, in_itemsize, tgt_itemsize):
    """Pixel-tile (lane) width driven by an honest per-pixel VMEM model."""
    # Double-buffered logits block (1, C, TPX): sublane dim C pads to the dtype tile.
    logits_px = 2 * _round_up(C, _sublane_tile(in_itemsize)) * in_itemsize
    # Double-buffered target block (1, 1, TPX): one sublane pads to a full tile
    # whatever the dtype (8*4 = 16*2 = 32*1 = 32 B per buffer).
    tgt_px = 2 * _sublane_tile(tgt_itemsize) * tgt_itemsize
    # In-kernel f32 temporaries: ~5 (C, TPX)-shaped values (cast / x-m / exp /
    # class iota / one-hot select, sublane-padded to 8) plus a handful of
    # (1, TPX)-shaped ones (max, lse, picked, masks, loss) that each still cost a
    # full 8-sublane vreg row when materialized.
    temps_px = 5 * _round_up(C, 8) * 4 + 6 * 8 * 4
    per_px = logits_px + tgt_px + temps_px

    px = _VMEM_MODEL_BUDGET // per_px
    px = min(px, max(128, _MAX_TILE_ELEMS // max(C, 1)))
    # Keep >= 4 grid steps total when possible so both v7x TensorCores get work
    # under the all-"parallel" grid.
    min_hw_steps = max(1, -(-4 // N))
    px = min(px, -(-HW // min_hw_steps))
    px = max(128, min(px, _round_up(HW, 128)))
    return (px // 128) * 128


def _ce_partial_kernel(logits_ref, target_ref, out_ref, *, ignore_index, hw, tile_px):
    # logits_ref: (1, C, TPX)   target_ref: (1, 1, TPX)   out_ref: (1, 1, 8, 128)
    x = logits_ref[0].astype(jnp.float32)            # (C, TPX) classes on sublanes
    t = target_ref[0].astype(jnp.int32)              # (1, TPX) widen narrow targets

    # numerically stable logsumexp over the class (sublane) axis
    m = jnp.max(x, axis=0, keepdims=True)                                # (1, TPX)
    lse = m + jnp.log(jnp.sum(jnp.exp(x - m), axis=0, keepdims=True))    # (1, TPX)

    # gather the target-class logit: one-hot select + class-axis reduce.
    # NOTE: assumes ignore_index >= C (true for 255 with typical class counts);
    # out-of-range targets silently pick 0 instead of erroring like PyTorch.
    cls = jax.lax.broadcasted_iota(jnp.int32, x.shape, 0)                # (C, TPX)
    picked = jnp.sum(jnp.where(cls == t, x, 0.0), axis=0, keepdims=True)  # (1, TPX)

    # Ragged-tail + ignore mask: the last pixel block may hang off the end of the
    # (unpadded) H*W axis; those lanes contain garbage logits/targets and must
    # contribute exactly 0 (jnp.where does not propagate NaN/Inf garbage).
    lane = jax.lax.broadcasted_iota(jnp.int32, t.shape, 1)               # (1, TPX)
    pix = pl.program_id(1) * tile_px + lane
    valid = (pix < hw) & (t != ignore_index)

    loss = jnp.where(valid, lse - picked, 0.0)                           # (1, TPX)

    # per-tile partial sum splatted into a lane-dense (8,128) tile: unmasked
    # full-tile store, and every grid step owns its own output block.
    out_ref[...] = jnp.full((1, 1, 8, 128), jnp.sum(loss), dtype=jnp.float32)


def cross_entropy_loss(prediction, target, *, weight=None, ignore_index=IGNORE_INDEX,
                       use_top_k=False, top_k_ratio=0.5, tile_px=None):
    """Matches CrossEntropyLoss.forward with weight=None, use_top_k=False."""
    assert weight is None        # TODO(synk): per-class weights not implemented
    assert not use_top_k         # TODO(synk): top-k (per-row sort) path not implemented
    del top_k_ratio

    N, C, H, W = prediction.shape
    HW = H * W
    P = N * HW

    # Free reshapes only — no HBM transpose, no HBM pad, no dtype up-cast.
    logits = prediction.reshape(N, C, HW)
    if not jnp.issubdtype(target.dtype, jnp.integer):
        target = target.astype(jnp.int32)
    tgt = target.reshape(N, 1, HW)

    if tile_px is None:
        tile_px = _choose_tile_px(C, HW, N, logits.dtype.itemsize, tgt.dtype.itemsize)
    tile_px = max(128, (tile_px // 128) * 128)
    grid_hw = pl.cdiv(HW, tile_px)

    partials = pl.pallas_call(
        functools.partial(_ce_partial_kernel, ignore_index=ignore_index,
                          hw=HW, tile_px=tile_px),
        out_shape=jax.ShapeDtypeStruct((N, grid_hw, 8, 128), jnp.float32),
        grid=(N, grid_hw),
        in_specs=[
            pl.BlockSpec((1, C, tile_px), lambda n, j: (n, 0, j)),
            pl.BlockSpec((1, 1, tile_px), lambda n, j: (n, 0, j)),
        ],
        out_specs=pl.BlockSpec((1, 1, 8, 128), lambda n, j: (n, j, 0, 0)),
        compiler_params=pltpu.CompilerParams(
            dimension_semantics=("parallel", "parallel"),
            vmem_limit_bytes=_VMEM_LIMIT_BYTES),
    )(logits, tgt)

    # torch.mean over loss.view(N, -1): divide by the total pixel count (ignored
    # pixels counted in the denominator, contributing 0 to the numerator).
    total = jnp.sum(partials[:, :, 0, 0])
    return total / P


def _reference(prediction, target, ignore_index=IGNORE_INDEX):
    # Pure-JAX reference mirroring F.cross_entropy(reduction='none') + mean.
    x = jnp.transpose(prediction, (0, 2, 3, 1)).astype(jnp.float32)  # (N,H,W,C)
    lse = jax.nn.logsumexp(x, axis=-1)
    t = target.astype(jnp.int32)
    safe_t = jnp.where(t == ignore_index, 0, t)
    picked = jnp.take_along_axis(x, safe_t[..., None], axis=-1)[..., 0]
    loss = jnp.where(t == ignore_index, 0.0, lse - picked)
    return jnp.mean(loss)


if __name__ == "__main__":
    key = jax.random.PRNGKey(0)
    k1, k2, k3 = jax.random.split(key, 3)

    N, C, H, W = 2, 4, 16, 16
    prediction = jax.random.normal(k1, (N, C, H, W), dtype=jnp.float32)
    target = jax.random.randint(k2, (N, H, W), 0, C, dtype=jnp.int32)
    ignore_mask = jax.random.uniform(k3, (N, H, W)) < 0.1
    target = jnp.where(ignore_mask, IGNORE_INDEX, target)

    # 1) f32 logits + int32 targets (the module's default dtypes)
    out = jax.block_until_ready(cross_entropy_loss(prediction, target))
    ref = _reference(prediction, target)
    assert jnp.allclose(out, ref, atol=1e-5, rtol=1e-5), (out, ref)

    # 2) bf16 logits + uint8 targets pass straight through (no wrapper upcast);
    #    math is f32 in-kernel, so it matches the f32 reference on the same
    #    bf16-rounded logits.
    pred_bf16 = prediction.astype(jnp.bfloat16)
    out_bf16 = jax.block_until_ready(
        cross_entropy_loss(pred_bf16, target.astype(jnp.uint8)))
    ref_bf16 = _reference(pred_bf16.astype(jnp.float32), target)
    assert jnp.allclose(out_bf16, ref_bf16, atol=1e-5, rtol=1e-5), (out_bf16, ref_bf16)

    # 3) H*W not a multiple of the 128-lane tile: exercises the in-kernel
    #    ragged-tail mask (no wrapper-side padding of the logits).
    Hr, Wr = 15, 17
    pred_r = jax.random.normal(k1, (N, C, Hr, Wr), dtype=jnp.float32)
    tgt_r = jax.random.randint(k2, (N, Hr, Wr), 0, C, dtype=jnp.int32)
    tgt_r = jnp.where(jax.random.uniform(k3, (N, Hr, Wr)) < 0.1, IGNORE_INDEX, tgt_r)
    out_r = jax.block_until_ready(cross_entropy_loss(pred_r, tgt_r))
    ref_r = _reference(pred_r, tgt_r)
    assert jnp.allclose(out_r, ref_r, atol=1e-5, rtol=1e-5), (out_r, ref_r)

    print("KERNEL_OK")
</pallas_src>

<mosaic_0001>
module attributes {stable_mosaic.version = 11 : i64} {
  func.func @_ce_partial_kernel(%arg0: i32, %arg1: i32, %arg2: memref<1x4x128xf32, #tpu.memory_space<vmem>>, %arg3: memref<1x1x128xi32, #tpu.memory_space<vmem>>, %arg4: memref<1x1x8x128xf32, #tpu.memory_space<vmem>>) attributes {dimension_semantics = [#tpu.dimension_semantics<parallel>, #tpu.dimension_semantics<parallel>], iteration_bounds = array<i64: 2, 2>, scalar_prefetch = 0 : i64, scratch_operands = 0 : i64, tpu.core_type = #tpu.core_type<tc>, window_params = [{transform_indices = @transform_0, window_bounds = array<i64: 1, 4, 128>}, {transform_indices = @transform_1, window_bounds = array<i64: 1, 1, 128>}, {transform_indices = @transform_2, window_bounds = array<i64: 1, 1, 8, 128>}]} {
    %c0 = arith.constant 0 : index
    %c0_0 = arith.constant 0 : index
    %c0_1 = arith.constant 0 : index
    %0 = vector.load %arg2[%c0, %c0_0, %c0_1] : memref<1x4x128xf32, #tpu.memory_space<vmem>>, vector<1x4x128xf32>
    %1 = vector.shape_cast %0 : vector<1x4x128xf32> to vector<4x128xf32>
    %c0_2 = arith.constant 0 : index
    %c0_3 = arith.constant 0 : index
    %c0_4 = arith.constant 0 : index
    %2 = vector.load %arg3[%c0_2, %c0_3, %c0_4] : memref<1x1x128xi32, #tpu.memory_space<vmem>>, vector<1x1x128xi32>
    %3 = vector.shape_cast %2 : vector<1x1x128xi32> to vector<1x128xi32>
    %cst = arith.constant dense<0xFF800000> : vector<128xf32>
    %4 = vector.multi_reduction <maximumf>, %1, %cst [0] : vector<4x128xf32> to vector<128xf32>
    %5 = vector.shape_cast %4 : vector<128xf32> to vector<1x128xf32>
    %6 = vector.broadcast %5 : vector<1x128xf32> to vector<4x128xf32>
    %7 = arith.subf %1, %6 : vector<4x128xf32>
    %8 = math.exp %7 : vector<4x128xf32>
    %cst_5 = arith.constant dense<0.000000e+00> : vector<128xf32>
    %9 = vector.multi_reduction <add>, %8, %cst_5 [0] : vector<4x128xf32> to vector<128xf32>
    %10 = vector.shape_cast %9 : vector<128xf32> to vector<1x128xf32>
    %11 = math.log %10 : vector<1x128xf32>
    %12 = arith.addf %5, %11 : vector<1x128xf32>
    %13 = tpu.iota {dimensions = array<i32: 0>} : vector<4x128xi32>
    %14 = vector.broadcast %3 : vector<1x128xi32> to vector<4x128xi32>
    %15 = arith.cmpi eq, %13, %14 : vector<4x128xi32>
    %cst_6 = arith.constant 0.000000e+00 : f32
    %16 = vector.broadcast %cst_6 : f32 to vector<4x128xf32>
    %17 = arith.select %15, %1, %16 : vector<4x128xi1>, vector<4x128xf32>
    %cst_7 = arith.constant dense<0.000000e+00> : vector<128xf32>
    %18 = vector.multi_reduction <add>, %17, %cst_7 [0] : vector<4x128xf32> to vector<128xf32>
    %19 = vector.shape_cast %18 : vector<128xf32> to vector<1x128xf32>
    %20 = tpu.iota {dimensions = array<i32: 1>} : vector<1x128xi32>
    %c128_i32 = arith.constant 128 : i32
    %21 = arith.muli %arg1, %c128_i32 : i32
    %22 = vector.broadcast %21 : i32 to vector<1x128xi32>
    %23 = arith.addi %22, %20 : vector<1x128xi32>
    %c256_i32 = arith.constant 256 : i32
    %24 = vector.broadcast %c256_i32 : i32 to vector<1x128xi32>
    %25 = arith.cmpi slt, %23, %24 : vector<1x128xi32>
    %c255_i32 = arith.constant 255 : i32
    %26 = vector.broadcast %c255_i32 : i32 to vector<1x128xi32>
    %27 = arith.cmpi ne, %3, %26 : vector<1x128xi32>
    %28 = arith.andi %25, %27 : vector<1x128xi1>
    %29 = arith.subf %12, %19 : vector<1x128xf32>
    %cst_8 = arith.constant 0.000000e+00 : f32
    %30 = vector.broadcast %cst_8 : f32 to vector<1x128xf32>
    %31 = arith.select %28, %29, %30 : vector<1x128xi1>, vector<1x128xf32>
    %32 = vector.shape_cast %31 : vector<1x128xf32> to vector<1x1x128xf32>
    %cst_9 = arith.constant dense<0.000000e+00> : vector<1xf32>
    %33 = vector.multi_reduction <add>, %32, %cst_9 [1, 2] : vector<1x1x128xf32> to vector<1xf32>
    %34 = vector.shape_cast %33 : vector<1xf32> to vector<1x1x1xf32>
    %35 = vector.extract %34[0, 0, 0] : f32 from vector<1x1x1xf32>
    %36 = vector.broadcast %35 : f32 to vector<1x1x8x128xf32>
    %c0_10 = arith.constant 0 : index
    %c0_11 = arith.constant 0 : index
    %c0_12 = arith.constant 0 : index
    %c0_13 = arith.constant 0 : index
    %37 = vector.load %arg4[%c0_10, %c0_11, %c0_12, %c0_13] : memref<1x1x8x128xf32, #tpu.memory_space<vmem>>, vector<1x1x8x128xf32>
    tpu.vector_store %arg4[%c0_10, %c0_11, %c0_12, %c0_13], %36 {strides = array<i32>} : memref<1x1x8x128xf32, #tpu.memory_space<vmem>>, vector<1x1x8x128xf32>,
    return
  }
  func.func @transform_0(%arg0: i32, %arg1: i32) -> (i32, i32, i32) {
    %c0_i32 = arith.constant 0 : i32
    %c0_i32_0 = arith.constant 0 : i32
    return %arg0, %c0_i32, %arg1 : i32, i32, i32
  }
  func.func @transform_1(%arg0: i32, %arg1: i32) -> (i32, i32, i32) {
    %c0_i32 = arith.constant 0 : i32
    %c0_i32_0 = arith.constant 0 : i32
    return %arg0, %c0_i32, %arg1 : i32, i32, i32
  }
  func.func @transform_2(%arg0: i32, %arg1: i32) -> (i32, i32, i32, i32) {
    %c0_i32 = arith.constant 0 : i32
    %c0_i32_0 = arith.constant 0 : i32
    %c0_i32_1 = arith.constant 0 : i32
    return %arg0, %arg1, %c0_i32, %c0_i32_0 : i32, i32, i32, i32
  }
}

</mosaic_0001>

<llo_original>
// kernel: tpu_custom_call.1
$region0: #{tpu_custom_call.1}
  #allocation0 [shape = 'u32[]', space=smem, size = 0x4, offset = 0x4, fixed_abs, tag = 'smem constant byte address 0x4 - core index']
  #allocation1 [shape = 'u32[72,128]{1,0:T(1,128)}', space=vmem, size = 0x9000, scoped, tag = 'internal scratch']
  %s0 = inlined_call_operand.hbm [shape: f32[2,4,256], index: 0, kind: input, shape index: {}]
  %s1 = inlined_call_operand.hbm [shape: s32[2,1,256], index: 1, kind: input, shape index: {}]
  %s2 = inlined_call_operand.hbm [shape: f32[2,2,8,128], index: 2, kind: output, shape index: {}]
  %s3 = sld [smem:[#allocation0]]
  $region49: #{tpu_custom_call.1} parent=0
    _
  %s5 = ssub.s32 1, %s3
  %s6 = scalar_select 0, %s5, %s3
  $region1: #{tpu_custom_call.1} parent=0
    #allocation2 [shape = 'u8[4096]{0}', space=vmem, size = 0x1000, scoped, tag = 'input window, operand 0']
    #allocation3 [shape = 's32[2]{0}', space=sflag, size = 0x8, scoped, tag = 'scoped memory for tpu_custom_call.1']
    #allocation4 [shape = 's32[2]{0}', space=sflag, size = 0x8, scoped, tag = 'scoped memory for tpu_custom_call.1']
    #allocation5 [shape = 'u8[1024]{0}', space=vmem, size = 0x400, scoped, tag = 'input window, operand 1']
    #allocation6 [shape = 's32[2]{0}', space=sflag, size = 0x8, scoped, tag = 'scoped memory for tpu_custom_call.1']
    #allocation7 [shape = 'u8[8192]{0}', space=vmem, size = 0x2000, scoped, tag = 'output window, operand 0']
    %7 = vsyncpa [#allocation3], 0
    %s8 = scalar_lea.sflag [#allocation3], 1
    %9 = vsyncpa %s8, 0
    %10 = vsyncpa [#allocation6], 0
    %s11 = scalar_lea.sflag [#allocation6], 1
    %12 = vsyncpa %s11, 0
    %13 = vsyncpa [#allocation4], 0
    %s14 = scalar_lea.sflag [#allocation4], 1
    %15 = vsyncpa %s14, 0
    loop: start=0, step=1, limit=6
    $region2: #{tpu_custom_call.1} parent=1 // loop_pre_header
      _
    $region3: #{tpu_custom_call.1} parent=1 // loop_header
      %s17 = sphi 0, %s21
      %p18 = scmp.ge.s32.totalorder %s17, 6
      %s24 = sphi 0, %s36
      %s25 = sphi 0, %s32
      %s26 = sphi 0, %s24
      %s27 = sphi 0, %s25
      %s28 = sphi 0, %s26
      %s29 = sphi 0, %s27
      %s41 = sphi 0, %s43
      %s44 = sphi 0, %s41
      %s45 = sphi 0, %s44
      %s61 = sphi 0, %s45
      %s69 = sphi 0, %s71
      %s72 = sphi 0, %s69
      %s73 = sphi 0, %s72
      %s89 = sphi 0, %s73
      %s97 = sphi 0, %s99
      %s100 = sphi 0, %s97
      %s101 = sphi 0, %s100
      %s117 = sphi 0, %s101
    $region4: #{tpu_custom_call.1} parent=1 // loop_header_branch
      %20 = sbr.rel (%p18) target = $region8
    $region5: #{tpu_custom_call.1} parent=1 // loop_body
      %s22 = ssub.s32 %s17, 1
      %s23 = ssub.s32 %s17, 2
      %s30 = sadd.s32 1, %s25
      %p31 = scmp.ge.s32.totalorder %s30, 2
      %s32 = scalar_select %p31, 0, %s30
      %s33 = sadd.s32 1, %s24
      %s34 = scalar_select %p31, %s33, %s24
      %p35 = scmp.ge.s32.totalorder %s34, 2
      %s36 = scalar_select %p35, 0, %s34
      %s37 = ssub.s32 %s24, %s36
      %s38 = ssub.s32 %s25, %s32
      %s39 = sor.u32 %s37, %s38
      %p40 = scmp.eq.s32.totalorder %s39, 0
      %s42 = sadd.s32 %s41, 1
      %s43 = scalar_select %p40, %s41, %s42
      %p46 = pneg %p40
      %p47 = scmp.eq.s32.totalorder %s17, 3
      %p48 = por %p46, %p47
      %p49 = scmp.ne.s32.totalorder %s41, %s44
      %p50 = scmp.eq.s32.totalorder %s17, 0
      %p51 = por %p49, %p50
      %p52 = scmp.ne.s32.totalorder %s41, %s44
      %p53 = scmp.eq.s32.totalorder %s22, 3
      %p54 = por %p52, %p53
      %p55 = scmp.ne.s32.totalorder %s44, %s45
      %p56 = scmp.eq.s32.totalorder %s22, 0
      %p57 = por %p55, %p56
      %p58 = scmp.ne.s32.totalorder %s44, %s45
      %p59 = scmp.eq.s32.totalorder %s23, 3
      %p60 = por %p58, %p59
      %p62 = scmp.ne.s32.totalorder %s45, %s61
      %p63 = scmp.eq.s32.totalorder %s23, 0
      %p64 = por %p62, %p63
      %s65 = ssub.s32 %s24, %s36
      %s66 = ssub.s32 %s25, %s32
      %s67 = sor.u32 %s65, %s66
      %p68 = scmp.eq.s32.totalorder %s67, 0
      %s70 = sadd.s32 %s69, 1
      %s71 = scalar_select %p68, %s69, %s70
      %p74 = pneg %p68
      %p75 = scmp.eq.s32.totalorder %s17, 3
      %p76 = por %p74, %p75
      %p77 = scmp.ne.s32.totalorder %s69, %s72
      %p78 = scmp.eq.s32.totalorder %s17, 0
      %p79 = por %p77, %p78
      %p80 = scmp.ne.s32.totalorder %s69, %s72
      %p81 = scmp.eq.s32.totalorder %s22, 3
      %p82 = por %p80, %p81
      %p83 = scmp.ne.s32.totalorder %s72, %s73
      %p84 = scmp.eq.s32.totalorder %s22, 0
      %p85 = por %p83, %p84
      %p86 = scmp.ne.s32.totalorder %s72, %s73
      %p87 = scmp.eq.s32.totalorder %s23, 3
      %p88 = por %p86, %p87
      %p90 = scmp.ne.s32.totalorder %s73, %s89
      %p91 = scmp.eq.s32.totalorder %s23, 0
      %p92 = por %p90, %p91
      %s93 = ssub.s32 %s24, %s36
      %s94 = ssub.s32 %s25, %s32
      %s95 = sor.u32 %s93, %s94
      %p96 = scmp.eq.s32.totalorder %s95, 0
      %s98 = sadd.s32 %s97, 1
      %s99 = scalar_select %p96, %s97, %s98
      %p102 = pneg %p96
      %p103 = scmp.eq.s32.totalorder %s17, 3
      %p104 = por %p102, %p103
      %p105 = scmp.ne.s32.totalorder %s97, %s100
      %p106 = scmp.eq.s32.totalorder %s17, 0
      %p107 = por %p105, %p106
      %p108 = scmp.ne.s32.totalorder %s97, %s100
      %p109 = scmp.eq.s32.totalorder %s22, 3
      %p110 = por %p108, %p109
      %p111 = scmp.ne.s32.totalorder %s100, %s101
      %p112 = scmp.eq.s32.totalorder %s22, 0
      %p113 = por %p111, %p112
      %p114 = scmp.ne.s32.totalorder %s100, %s101
      %p115 = scmp.eq.s32.totalorder %s23, 3
      %p116 = por %p114, %p115
      %p118 = scmp.ne.s32.totalorder %s101, %s117
      %p119 = scmp.eq.s32.totalorder %s23, 0
      %p120 = por %p118, %p119
      %p121 = scmp.le.s32.totalorder 1, %s17
      %p122 = scmp.lt.s32.totalorder %s17, 5
      %p123 = pnand %p121, %p122
      %p124 = pneg %p123
      // Predicated region
      $region9: #{tpu_custom_call.1} parent=5 // pred_check
        _
      $region10: #{tpu_custom_call.1} parent=5 // pred_check_branch
        %126 = sbr.rel (%p123) target = $region12
      $region11: #{tpu_custom_call.1} parent=5 // pred_region
        %s127 = ssub.s32 %s17, 1
      $region12: #{tpu_custom_call.1} parent=5 // pred_fallthru
        _
      %p128 = scmp.lt.s32.totalorder %s17, 4
      // Predicated region
      $region13: #{tpu_custom_call.1} parent=5 // pred_check
        %p129 = pneg %p128
      $region14: #{tpu_custom_call.1} parent=5 // pred_check_branch
        %131 = sbr.rel (%p129) target = $region16
      $region15: #{tpu_custom_call.1} parent=5 // pred_region
        // Predicated region
        $region17: #{tpu_custom_call.1} parent=15 // pred_check
          %p132 = pneg %p51
        $region18: #{tpu_custom_call.1} parent=15 // pred_check_branch
          %134 = sbr.rel (%p132) target = $region20
        $region19: #{tpu_custom_call.1} parent=15 // pred_region
          %s135 = sand.u32 %s41, 1
          %s136 = scalar_lea.sflag [#allocation3], %s135
          %s137 = sand.u32 %s41, 1
          %s138 = smul.addr %s137, 4
          %s139 = scalar_lea.vmem [#allocation2], %s138
          %141 = vsyncadd %s136, 0
          %s142 = smul.addr %s24, 2
          %s143 = sadd.s32 %s25, %s142
          %s144 = smul.addr %s143, 4
          %s145 = scalar_lea.hbm %s0, %s144
          %s147 = sshll.u32 %s145, 4
          %s148 = int_to_ptr.hbm [resolvable:$true] %s147
          %s149 = sshll.u32 %s139, 4
          %s150 = int_to_ptr.vmem [resolvable:$true] %s149
          %152 = dma.hbm_to_vmem [thread:$0]  %s148, 64, %s150, %s136
        $region20: #{tpu_custom_call.1} parent=15 // pred_fallthru
          _
        // Predicated region
        $region21: #{tpu_custom_call.1} parent=15 // pred_check
          %p153 = pneg %p79
        $region22: #{tpu_custom_call.1} parent=15 // pred_check_branch
          %155 = sbr.rel (%p153) target = $region24
        $region23: #{tpu_custom_call.1} parent=15 // pred_region
          %s156 = sand.u32 %s69, 1
          %s157 = scalar_lea.sflag [#allocation6], %s156
          %s158 = sand.u32 %s69, 1
          %s159 = scalar_lea.vmem [#allocation5], %s158
          %161 = vsyncadd %s157, 0
          %s162 = smul.addr %s24, 2
          %s163 = sadd.s32 %s25, %s162
          %s164 = scalar_lea.hbm %s1, %s163
          %s166 = sshll.u32 %s164, 4
          %s167 = int_to_ptr.hbm [resolvable:$true] %s166
          %s168 = sshll.u32 %s159, 4
          %s169 = int_to_ptr.vmem [resolvable:$true] %s168
          %171 = dma.hbm_to_vmem [thread:$0]  %s167, 16, %s169, %s157
        $region24: #{tpu_custom_call.1} parent=15 // pred_fallthru
          _
      $region16: #{tpu_custom_call.1} parent=5 // pred_fallthru
        _
      %p172 = scmp.le.s32.totalorder 1, %s17
      %p173 = scmp.lt.s32.totalorder %s17, 5
      %p174 = pnand %p172, %p173
      %p175 = pneg %p174
      // Predicated region
      $region25: #{tpu_custom_call.1} parent=5 // pred_check
        _
      $region26: #{tpu_custom_call.1} parent=5 // pred_check_branch
        %177 = sbr.rel (%p174) target = $region28
      $region27: #{tpu_custom_call.1} parent=5 // pred_region
        %s178 = ssub.s32 %s17, 1
        %s179 = sand.u32 %s44, 1
        %s180 = scalar_lea.sflag [#allocation3], %s179
        %s181 = sand.u32 %s44, 1
        %s182 = smul.addr %s181, 4
        %s183 = scalar_lea.vmem [#allocation2], %s182
        // Predicated region
        $region29: #{tpu_custom_call.1} parent=27 // pred_check
          %p184 = pneg %p57
        $region30: #{tpu_custom_call.1} parent=27 // pred_check_branch
          %186 = sbr.rel (%p184) target = $region32
        $region31: #{tpu_custom_call.1} parent=27 // pred_region
          %188 = dma.done %s180, 64
        $region32: #{tpu_custom_call.1} parent=27 // pred_fallthru
          _
        %s189 = sand.u32 %s72, 1
        %s190 = scalar_lea.sflag [#allocation6], %s189
        %s191 = sand.u32 %s72, 1
        %s192 = scalar_lea.vmem [#allocation5], %s191
        // Predicated region
        $region33: #{tpu_custom_call.1} parent=27 // pred_check
          %p193 = pneg %p85
        $region34: #{tpu_custom_call.1} parent=27 // pred_check_branch
          %195 = sbr.rel (%p193) target = $region36
        $region35: #{tpu_custom_call.1} parent=27 // pred_region
          %197 = dma.done %s190, 16
        $region36: #{tpu_custom_call.1} parent=27 // pred_fallthru
          _
        %s198 = sand.u32 %s44, 1
        %s199 = scalar_lea.sflag [#allocation3], %s198
        %s200 = sand.u32 %s44, 1
        %s201 = smul.addr %s200, 4
        %s202 = scalar_lea.vmem [#allocation2], %s201
        %p203 = pneg %p57
        %p204 = pneg %p54
        %s205 = sand.u32 %s72, 1
        %s206 = scalar_lea.sflag [#allocation6], %s205
        %s207 = sand.u32 %s72, 1
        %s208 = scalar_lea.vmem [#allocation5], %s207
        %p209 = pneg %p85
        %p210 = pneg %p82
        %p211 = pneg %p113
        %p212 = pneg %p110
        %s213 = sand.u32 %s100, 1
        %s214 = scalar_lea.sflag [#allocation4], %s213
        %s215 = sand.u32 %s100, 1
        %s216 = smul.addr %s215, 8
        %s217 = scalar_lea.vmem [#allocation7], %s216
        %v218 = vld [vmem:[%s183] sm:$0xf]
        %v219 = vld [vmem:[%s192] sm:$0x1]
        %vm220 = vcmask 1043456
        %v221 = vsel %vm220, %v218, -inf
        %v222 = vrot.slane %v221, 4
        %v223 = vmax.f32 %v221, %v222
        %v224 = vrot.slane %v223, 2
        %v225 = vmax.f32 %v223, %v224
        %v226 = vrot.slane %v225, 1
        %v227 = vmax.f32 %v225, %v226
        %v228 = vsub.f32 %v218, %v227
        %v229 = vmul.f32 %v228, 1.442695
        %v230 = vpow.pop %v229
        %v231 = vsel %vm220, %v230, 0.0
        %v232 = vrot.slane %v231, 4
        %v233 = vadd.f32 %v231, %v232
        %v234 = vrot.slane %v233, 2
        %v235 = vadd.f32 %v233, %v234
        %v236 = vrot.slane %v235, 1
        %v237 = vadd.f32 %v235, %v236
        %v238 = vlog2.pop %v237
        %v239 = vmul.f32 %v238, 0.6931472
        %v240 = vadd.f32 %v227, %v239
        %v241 = vlaneseq
        %v242 = vshrl.u32 %v241, 7
        %v243 = vperm.slane %v219, 0
        %vm244 = vcmp.eq.s32.totalorder %v242, %v243
        %v245 = vsel %vm244, %v218, 0.0
        %v246 = vsel %vm220, %v245, 0.0
        %v247 = vrot.slane %v246, 4
        %v248 = vadd.f32 %v246, %v247
        %v249 = vrot.slane %v248, 2
        %v250 = vadd.f32 %v248, %v249
        %v251 = vrot.slane %v250, 1
        %v252 = vadd.f32 %v250, %v251
        %v253 = vlaneseq
        %v254 = vand.u32 %v253, 127
        %s255 = smul.u32 %s27, 128
        %v256 = vstv %s255
        %v257 = vadd.s32 %v256, %v254
        %vm258 = vcmp.lt.s32.totalorder %v257, 256
        %vm259 = vcmp.ne.s32.totalorder %v219, 255
        %vm260 = vmand %vm258, %vm259
        %v261 = vsub.f32 %v240, %v252
        %v262 = vsel %vm260, %v261, 0.0
        %vm263 = vcmask 1040384
        %v264 = vsel %vm263, %v262, 0.0
        %265 = vadd.xlane.f32.xlu0 %v264
        %v266 = vpop.xlane.xlu0 %265
        %v267 = vrot.slane %v266, 4
        %v268 = vadd.f32 %v266, %v267
        %v269 = vrot.slane %v268, 2
        %v270 = vadd.f32 %v268, %v269
        %v271 = vrot.slane %v270, 1
        %v272 = vadd.f32 %v270, %v271
        %s273 = vtos %v272
        %v274 = vstv %s273
        %275 = vst [vmem:[%s217] sm:$0xff] %v274
        %s276 = sand.u32 %s100, 1
        %s277 = scalar_lea.sflag [#allocation4], %s276
        %s278 = sand.u32 %s100, 1
        %s279 = smul.addr %s278, 8
        %s280 = scalar_lea.vmem [#allocation7], %s279
        // Predicated region
        $region37: #{tpu_custom_call.1} parent=27 // pred_check
          %p281 = pneg %p110
        $region38: #{tpu_custom_call.1} parent=27 // pred_check_branch
          %283 = sbr.rel (%p281) target = $region40
        $region39: #{tpu_custom_call.1} parent=27 // pred_region
          %285 = vsyncadd %s277, 0
          %s286 = smul.addr %s26, 2
          %s287 = sadd.s32 %s27, %s286
          %s288 = smul.addr %s287, 8
          %s289 = scalar_lea.hbm %s2, %s288
          %s291 = sshll.u32 %s280, 4
          %s292 = int_to_ptr.vmem [resolvable:$true] %s291
          %s293 = sshll.u32 %s289, 4
          %s294 = int_to_ptr.hbm [resolvable:$true] %s293
          %296 = dma.vmem_to_hbm [thread:$0]  %s292, 128, %s294, %s277
        $region40: #{tpu_custom_call.1} parent=27 // pred_fallthru
          _
      $region28: #{tpu_custom_call.1} parent=5 // pred_fallthru
        _
      %p297 = scmp.le.s32.totalorder 2, %s17
      // Predicated region
      $region41: #{tpu_custom_call.1} parent=5 // pred_check
        %p298 = pneg %p297
      $region42: #{tpu_custom_call.1} parent=5 // pred_check_branch
        %300 = sbr.rel (%p298) target = $region44
      $region43: #{tpu_custom_call.1} parent=5 // pred_region
        %s301 = ssub.s32 %s17, 2
        // Predicated region
        $region45: #{tpu_custom_call.1} parent=43 // pred_check
          %p302 = pneg %p116
        $region46: #{tpu_custom_call.1} parent=43 // pred_check_branch
          %304 = sbr.rel (%p302) target = $region48
        $region47: #{tpu_custom_call.1} parent=43 // pred_region
          %s305 = sand.u32 %s101, 1
          %s306 = scalar_lea.sflag [#allocation4], %s305
          %s307 = sand.u32 %s101, 1
          %s308 = smul.addr %s307, 8
          %s309 = scalar_lea.vmem [#allocation7], %s308
          %311 = dma.done %s306, 128
        $region48: #{tpu_custom_call.1} parent=43 // pred_fallthru
          _
      $region44: #{tpu_custom_call.1} parent=5 // pred_fallthru
        _
    $region6: #{tpu_custom_call.1} parent=1 // loop_footer
      %s21 = sadd.s32 1, %s17
    $region7: #{tpu_custom_call.1} parent=1 // loop_footer_branch
      %16 = sbr.rel target = $region3
    $region8: #{tpu_custom_call.1} parent=1 // loop_exit
      _
    %312 = vsyncpa [#allocation3], 1
    %s313 = scalar_lea.sflag [#allocation3], 1
    %314 = vsyncpa %s313, 1
    %315 = vsyncpa [#allocation6], 1
    %s316 = scalar_lea.sflag [#allocation6], 1
    %317 = vsyncpa %s316, 1
    %318 = vsyncpa [#allocation4], 1
    %s319 = scalar_lea.sflag [#allocation4], 1
    %320 = vsyncpa %s319, 1

</llo_original>
